<compile_context>
chip_gen: v5e
topology: v5e:2x2
jax: 0.10.0
libtpu: 0.0.40
codegen_flags: <defaults>
</compile_context>

<pallas_src>
import math
from functools import partial

import jax
import jax.numpy as jnp
from jax.experimental import pallas as pl
from jax.experimental.pallas import tpu as pltpu


def _gelu_exact(x):
    # nn.GELU() default in PyTorch = exact erf formulation.
    return 0.5 * x * (1.0 + jax.lax.erf(x / math.sqrt(2.0)))


def _dsconv2d_kernel(x_ref, wdw_ref, bdw_ref, wblk_ref, bpw_ref, o_ref, xpad_ref,
                     *, KH, KW, Cin, pad, Ho, WoC):
    # x_ref    : (Nb, H, W*Cin)     unpadded input block, lane-packed (w, c) minor axis
    # wdw_ref  : (KH*KW, Wo*Cin)    depthwise tap weights, pre-tiled across Wo
    # bdw_ref  : (1, Wo*Cin)        depthwise bias, pre-tiled across Wo
    # wblk_ref : (Wo*Cin, Wo*Cout)  block-diagonal kron(I_Wo, w_pw)
    # bpw_ref  : (1, Wo*Cout)       pointwise bias, pre-tiled across Wo
    # o_ref    : (Nb*Ho, Wo*Cout)   lane-dense output slab (minor axis = 128 here)
    # xpad_ref : (Nb, Hp, Wp*Cin)   VMEM scratch: zero-padded copy of the input block
    Nb, H, WCin = x_ref.shape

    # ---- Fold the spatial zero-pad into the kernel (no jnp.pad HBM pass). ----
    xpad_ref[...] = jnp.zeros(xpad_ref.shape, xpad_ref.dtype)
    xpad_ref[:, pl.ds(pad, H), pl.ds(pad * Cin, WCin)] = x_ref[...].astype(xpad_ref.dtype)

    # ---- Depthwise conv: static unroll over taps; each tap is a contiguous slice of
    #      the padded scratch (no materialized full-image value re-sliced in registers).
    #      Tap lane offsets (kw*Cin) are small; the residual XLU shift work is negligible
    #      next to the single fixed per-call overhead at these sizes. ----
    acc = jnp.zeros((Nb, Ho, WoC), jnp.float32)
    for kh in range(KH):
        for kw in range(KW):
            patch = xpad_ref[:, pl.ds(kh, Ho), pl.ds(kw * Cin, WoC)]
            w_tap = wdw_ref[pl.ds(kh * KW + kw, 1), :].reshape(1, 1, WoC)
            acc = acc + patch * w_tap

    h = _gelu_exact(acc + bdw_ref[...].reshape(1, 1, WoC))          # (Nb, Ho, Wo*Cin)

    # ---- Pointwise 1x1 conv: ONE lane-dense MXU matmul over all batch rows:
    #      (Nb*Ho, Wo*Cin) @ (Wo*Cin, Wo*Cout) -> (Nb*Ho, Wo*Cout). ----
    h2 = h.reshape(Nb * Ho, WoC)
    y = jnp.dot(h2, wblk_ref[...], preferred_element_type=jnp.float32)
    y = _gelu_exact(y + bpw_ref[...])                               # (Nb*Ho, Wo*Cout)

    o_ref[...] = y.astype(o_ref.dtype)


def precompute_dsconv2d_constants(w_dw, b_dw, w_pw, b_pw, *, W, padding, kernel_size):
    """Constant weight transforms, hoisted out of the per-forward path (do once at init).

    w_dw : (KH, KW, Cin)   depthwise weight (torch (Cin,1,K,K) -> (K,K,Cin))
    b_dw : (Cin,)
    w_pw : (Cin, Cout)     pointwise weight (torch (Cout,Cin,1,1) -> (Cin,Cout))
    b_pw : (Cout,)
    """
    KH, KW, Cin = w_dw.shape
    Cout = w_pw.shape[1]
    assert KH == KW == kernel_size
    Wp = W + 2 * padding
    Wo = Wp - KW + 1
    f32 = jnp.float32

    w_dw_tiled = jnp.tile(w_dw.reshape(KH * KW, 1, Cin), (1, Wo, 1)) \
                    .reshape(KH * KW, Wo * Cin).astype(f32)
    b_dw_tiled = jnp.tile(b_dw.reshape(1, 1, Cin), (1, Wo, 1)).reshape(1, Wo * Cin).astype(f32)
    # Block-diagonal pointwise weight (Wo*Cin, Wo*Cout). Footprint scales as Wo^2*Cin*Cout.
    # TODO(synk): for large Wo, tile the pointwise stage over Wo blocks instead of one kron.
    w_block = jnp.kron(jnp.eye(Wo, dtype=f32), w_pw.astype(f32))
    b_pw_tiled = jnp.tile(b_pw.reshape(1, 1, Cout), (1, Wo, 1)).reshape(1, Wo * Cout).astype(f32)

    return dict(w_dw_tiled=w_dw_tiled, b_dw_tiled=b_dw_tiled,
                w_block=w_block, b_pw_tiled=b_pw_tiled)


def ds_conv2d(x_nchw, consts, *, kernel_size, padding, stride=1, n_blocks=1):
    """DsConv2d forward.

    x_nchw : (N, Cin, H, W) input, PyTorch NCHW layout.
    consts : output of precompute_dsconv2d_constants (computed once at init).
    n_blocks : batch split over a "parallel" grid axis. Keep 1 on v5e/v6e (single TC);
               use 2 on v7x to occupy both TensorCores when N >= 2.
    returns (N, Cout, Ho, Wo) in NCHW.
    """
    N, Cin, H, W = x_nchw.shape
    KH = KW = kernel_size
    # TODO(synk): stride > 1 would need a strided lane-gather of the packed taps;
    # the module is used with its default stride=1, which is all we implement here.
    assert stride == 1, "optimized lane-packed DsConv2d kernel supports stride=1"
    assert N % n_blocks == 0, "n_blocks must divide the batch size"
    Nb = N // n_blocks

    Hp, Wp = H + 2 * padding, W + 2 * padding
    Ho, Wo = Hp - KH + 1, Wp - KW + 1
    WoC = Wo * Cin
    WoCout = consts["w_block"].shape[1]
    Cout = WoCout // Wo
    assert consts["w_block"].shape == (WoC, WoCout)

    # NCHW -> NHWC -> lane-pack (w, c) into the minor axis. (The transpose is required
    # by the NCHW interface; padding is folded into the kernel, so no jnp.pad pass.)
    x_pack = jnp.transpose(x_nchw, (0, 2, 3, 1)).reshape(N, H, W * Cin)

    kernel = partial(_dsconv2d_kernel, KH=KH, KW=KW, Cin=Cin, pad=padding, Ho=Ho, WoC=WoC)

    out2d = pl.pallas_call(
        kernel,
        out_shape=jax.ShapeDtypeStruct((N * Ho, WoCout), x_nchw.dtype),
        grid_spec=pltpu.PrefetchScalarGridSpec(
            num_scalar_prefetch=0,
            grid=(n_blocks,),   # 1 => single invocation; 2 => both TCs on v7x
            in_specs=[
                pl.BlockSpec((Nb, H, W * Cin), lambda b: (b, 0, 0)),
                pl.BlockSpec((KH * KW, WoC), lambda b: (0, 0)),
                pl.BlockSpec((1, WoC), lambda b: (0, 0)),
                pl.BlockSpec((WoC, WoCout), lambda b: (0, 0)),
                pl.BlockSpec((1, WoCout), lambda b: (0, 0)),
            ],
            out_specs=pl.BlockSpec((Nb * Ho, WoCout), lambda b: (b, 0)),
            scratch_shapes=[pltpu.VMEM((Nb, Hp, Wp * Cin), jnp.float32)],
        ),
        compiler_params=pltpu.CompilerParams(dimension_semantics=("parallel",)),
    )(x_pack, consts["w_dw_tiled"], consts["b_dw_tiled"],
      consts["w_block"], consts["b_pw_tiled"])

    # (N*Ho, Wo*Cout) -> (N, Ho, Wo, Cout) -> NCHW (layout-preserving reshape + one transpose).
    return jnp.transpose(out2d.reshape(N, Ho, Wo, Cout), (0, 3, 1, 2))


def _reference(x_nchw, w_dw, b_dw, w_pw, b_pw, *, padding, stride):
    # Pure-JAX reference (XLA convs) for verification.
    Cin = x_nchw.shape[1]
    w_dw_oihw = jnp.transpose(w_dw, (2, 0, 1))[:, None, :, :]   # (Cin, 1, KH, KW)
    dw = jax.lax.conv_general_dilated(
        x_nchw.astype(jnp.float32), w_dw_oihw.astype(jnp.float32),
        window_strides=(stride, stride),
        padding=[(padding, padding), (padding, padding)],
        feature_group_count=Cin,
        dimension_numbers=("NCHW", "OIHW", "NCHW"))
    dw = dw + b_dw[None, :, None, None]
    h = _gelu_exact(dw)
    y = jnp.einsum("nchw,co->nohw", h, w_pw.astype(jnp.float32))
    y = y + b_pw[None, :, None, None]
    return _gelu_exact(y).astype(x_nchw.dtype)


if __name__ == "__main__":
    # Small shapes consistent with the module: dim_in=4, dim_out=8, k=3, pad=1.
    N, Cin, H, W = 2, 4, 16, 16
    Cout, K, PAD, STRIDE = 8, 3, 1, 1

    key = jax.random.PRNGKey(0)
    kx, k1, k2, k3, k4 = jax.random.split(key, 5)

    x = jax.random.normal(kx, (N, Cin, H, W), dtype=jnp.float32)
    # Deterministic parameter init (synthetic; shapes from nn.Conv2d in __init__).
    fan_dw = (Cin // Cin) * K * K        # groups=Cin -> in_ch per group = 1
    bound_dw = 1.0 / math.sqrt(fan_dw)
    w_dw = jax.random.uniform(k1, (K, K, Cin), jnp.float32, -bound_dw, bound_dw)
    b_dw = jax.random.uniform(k2, (Cin,), jnp.float32, -bound_dw, bound_dw)
    bound_pw = 1.0 / math.sqrt(Cin)
    w_pw = jax.random.uniform(k3, (Cin, Cout), jnp.float32, -bound_pw, bound_pw)
    b_pw = jax.random.uniform(k4, (Cout,), jnp.float32, -bound_pw, bound_pw)

    # Constant weight transforms: computed ONCE (module init), not per forward.
    consts = precompute_dsconv2d_constants(w_dw, b_dw, w_pw, b_pw,
                                           W=W, padding=PAD, kernel_size=K)
    consts = jax.tree_util.tree_map(jax.block_until_ready, consts)

    fwd = jax.jit(partial(ds_conv2d, kernel_size=K, padding=PAD, stride=STRIDE, n_blocks=1))
    out = jax.block_until_ready(fwd(x, consts))

    ref = _reference(x, w_dw, b_dw, w_pw, b_pw, padding=PAD, stride=STRIDE)
    assert out.shape == (N, Cout, H, W), out.shape
    assert jnp.allclose(out, ref, rtol=1e-5, atol=1e-5), float(jnp.max(jnp.abs(out - ref)))

    print("KERNEL_OK")
</pallas_src>

<mosaic_0001>
module attributes {stable_mosaic.version = 11 : i64} {
  func.func @_dsconv2d_kernel(%arg0: i32, %arg1: memref<2x16x64xf32, #tpu.memory_space<vmem>>, %arg2: memref<9x64xf32, #tpu.memory_space<vmem>>, %arg3: memref<1x64xf32, #tpu.memory_space<vmem>>, %arg4: memref<64x128xf32, #tpu.memory_space<vmem>>, %arg5: memref<1x128xf32, #tpu.memory_space<vmem>>, %arg6: memref<32x128xf32, #tpu.memory_space<vmem>>, %arg7: memref<2x18x72xf32, #tpu.memory_space<vmem>>) attributes {dimension_semantics = [#tpu.dimension_semantics<parallel>], iteration_bounds = array<i64: 1>, scalar_prefetch = 0 : i64, scratch_operands = 1 : i64, tpu.core_type = #tpu.core_type<tc>, window_params = [{transform_indices = @transform_0, window_bounds = array<i64: 2, 16, 64>}, {pipeline_mode = #tpu.pipeline_mode<synchronous>, transform_indices = @transform_1, window_bounds = array<i64: 9, 64>}, {pipeline_mode = #tpu.pipeline_mode<synchronous>, transform_indices = @transform_2, window_bounds = array<i64: 1, 64>}, {pipeline_mode = #tpu.pipeline_mode<synchronous>, transform_indices = @transform_3, window_bounds = array<i64: 64, 128>}, {pipeline_mode = #tpu.pipeline_mode<synchronous>, transform_indices = @transform_4, window_bounds = array<i64: 1, 128>}, {transform_indices = @transform_5, window_bounds = array<i64: 32, 128>}]} {
    %cst = arith.constant 0.000000e+00 : f32
    %0 = vector.broadcast %cst : f32 to vector<2x18x72xf32>
    %c0 = arith.constant 0 : index
    %c0_0 = arith.constant 0 : index
    %c0_1 = arith.constant 0 : index
    %1 = vector.load %arg7[%c0, %c0_0, %c0_1] : memref<2x18x72xf32, #tpu.memory_space<vmem>>, vector<2x18x72xf32>
    tpu.vector_store %arg7[%c0, %c0_0, %c0_1], %0 {strides = array<i32>} : memref<2x18x72xf32, #tpu.memory_space<vmem>>, vector<2x18x72xf32>,
    %c0_2 = arith.constant 0 : index
    %c0_3 = arith.constant 0 : index
    %c0_4 = arith.constant 0 : index
    %2 = vector.load %arg1[%c0_2, %c0_3, %c0_4] : memref<2x16x64xf32, #tpu.memory_space<vmem>>, vector<2x16x64xf32>
    %c0_5 = arith.constant 0 : index
    %c1 = arith.constant 1 : index
    %c4 = arith.constant 4 : index
    %3 = vector.load %arg7[%c0_5, %c1, %c4] : memref<2x18x72xf32, #tpu.memory_space<vmem>>, vector<2x16x64xf32>
    tpu.vector_store %arg7[%c0_5, %c1, %c4], %2 {strides = array<i32>} : memref<2x18x72xf32, #tpu.memory_space<vmem>>, vector<2x16x64xf32>,
    %cst_6 = arith.constant 0.000000e+00 : f32
    %4 = vector.broadcast %cst_6 : f32 to vector<2x16x64xf32>
    %c0_7 = arith.constant 0 : index
    %c0_8 = arith.constant 0 : index
    %c0_9 = arith.constant 0 : index
    %5 = vector.load %arg7[%c0_7, %c0_8, %c0_9] : memref<2x18x72xf32, #tpu.memory_space<vmem>>, vector<2x16x64xf32>
    %c0_10 = arith.constant 0 : index
    %c0_11 = arith.constant 0 : index
    %6 = vector.load %arg2[%c0_10, %c0_11] : memref<9x64xf32, #tpu.memory_space<vmem>>, vector<1x64xf32>
    %7 = vector.shape_cast %6 : vector<1x64xf32> to vector<1x1x64xf32>
    %8 = vector.broadcast %7 : vector<1x1x64xf32> to vector<2x16x64xf32>
    %9 = arith.mulf %5, %8 : vector<2x16x64xf32>
    %10 = arith.addf %4, %9 : vector<2x16x64xf32>
    %c0_12 = arith.constant 0 : index
    %c0_13 = arith.constant 0 : index
    %c4_14 = arith.constant 4 : index
    %11 = vector.load %arg7[%c0_12, %c0_13, %c4_14] : memref<2x18x72xf32, #tpu.memory_space<vmem>>, vector<2x16x64xf32>
    %c1_15 = arith.constant 1 : index
    %c0_16 = arith.constant 0 : index
    %12 = vector.load %arg2[%c1_15, %c0_16] : memref<9x64xf32, #tpu.memory_space<vmem>>, vector<1x64xf32>
    %13 = vector.shape_cast %12 : vector<1x64xf32> to vector<1x1x64xf32>
    %14 = vector.broadcast %13 : vector<1x1x64xf32> to vector<2x16x64xf32>
    %15 = arith.mulf %11, %14 : vector<2x16x64xf32>
    %16 = arith.addf %10, %15 : vector<2x16x64xf32>
    %c0_17 = arith.constant 0 : index
    %c0_18 = arith.constant 0 : index
    %c8 = arith.constant 8 : index
    %17 = vector.load %arg7[%c0_17, %c0_18, %c8] : memref<2x18x72xf32, #tpu.memory_space<vmem>>, vector<2x16x64xf32>
    %c2 = arith.constant 2 : index
    %c0_19 = arith.constant 0 : index
    %18 = vector.load %arg2[%c2, %c0_19] : memref<9x64xf32, #tpu.memory_space<vmem>>, vector<1x64xf32>
    %19 = vector.shape_cast %18 : vector<1x64xf32> to vector<1x1x64xf32>
    %20 = vector.broadcast %19 : vector<1x1x64xf32> to vector<2x16x64xf32>
    %21 = arith.mulf %17, %20 : vector<2x16x64xf32>
    %22 = arith.addf %16, %21 : vector<2x16x64xf32>
    %c0_20 = arith.constant 0 : index
    %c1_21 = arith.constant 1 : index
    %c0_22 = arith.constant 0 : index
    %23 = vector.load %arg7[%c0_20, %c1_21, %c0_22] : memref<2x18x72xf32, #tpu.memory_space<vmem>>, vector<2x16x64xf32>
    %c3 = arith.constant 3 : index
    %c0_23 = arith.constant 0 : index
    %24 = vector.load %arg2[%c3, %c0_23] : memref<9x64xf32, #tpu.memory_space<vmem>>, vector<1x64xf32>
    %25 = vector.shape_cast %24 : vector<1x64xf32> to vector<1x1x64xf32>
    %26 = vector.broadcast %25 : vector<1x1x64xf32> to vector<2x16x64xf32>
    %27 = arith.mulf %23, %26 : vector<2x16x64xf32>
    %28 = arith.addf %22, %27 : vector<2x16x64xf32>
    %c0_24 = arith.constant 0 : index
    %c1_25 = arith.constant 1 : index
    %c4_26 = arith.constant 4 : index
    %29 = vector.load %arg7[%c0_24, %c1_25, %c4_26] : memref<2x18x72xf32, #tpu.memory_space<vmem>>, vector<2x16x64xf32>
    %c4_27 = arith.constant 4 : index
    %c0_28 = arith.constant 0 : index
    %30 = vector.load %arg2[%c4_27, %c0_28] : memref<9x64xf32, #tpu.memory_space<vmem>>, vector<1x64xf32>
    %31 = vector.shape_cast %30 : vector<1x64xf32> to vector<1x1x64xf32>
    %32 = vector.broadcast %31 : vector<1x1x64xf32> to vector<2x16x64xf32>
    %33 = arith.mulf %29, %32 : vector<2x16x64xf32>
    %34 = arith.addf %28, %33 : vector<2x16x64xf32>
    %c0_29 = arith.constant 0 : index
    %c1_30 = arith.constant 1 : index
    %c8_31 = arith.constant 8 : index
    %35 = vector.load %arg7[%c0_29, %c1_30, %c8_31] : memref<2x18x72xf32, #tpu.memory_space<vmem>>, vector<2x16x64xf32>
    %c5 = arith.constant 5 : index
    %c0_32 = arith.constant 0 : index
    %36 = vector.load %arg2[%c5, %c0_32] : memref<9x64xf32, #tpu.memory_space<vmem>>, vector<1x64xf32>
    %37 = vector.shape_cast %36 : vector<1x64xf32> to vector<1x1x64xf32>
    %38 = vector.broadcast %37 : vector<1x1x64xf32> to vector<2x16x64xf32>
    %39 = arith.mulf %35, %38 : vector<2x16x64xf32>
    %40 = arith.addf %34, %39 : vector<2x16x64xf32>
    %c0_33 = arith.constant 0 : index
    %c2_34 = arith.constant 2 : index
    %c0_35 = arith.constant 0 : index
    %41 = vector.load %arg7[%c0_33, %c2_34, %c0_35] : memref<2x18x72xf32, #tpu.memory_space<vmem>>, vector<2x16x64xf32>
    %c6 = arith.constant 6 : index
    %c0_36 = arith.constant 0 : index
    %42 = vector.load %arg2[%c6, %c0_36] : memref<9x64xf32, #tpu.memory_space<vmem>>, vector<1x64xf32>
    %43 = vector.shape_cast %42 : vector<1x64xf32> to vector<1x1x64xf32>
    %44 = vector.broadcast %43 : vector<1x1x64xf32> to vector<2x16x64xf32>
    %45 = arith.mulf %41, %44 : vector<2x16x64xf32>
    %46 = arith.addf %40, %45 : vector<2x16x64xf32>
    %c0_37 = arith.constant 0 : index
    %c2_38 = arith.constant 2 : index
    %c4_39 = arith.constant 4 : index
    %47 = vector.load %arg7[%c0_37, %c2_38, %c4_39] : memref<2x18x72xf32, #tpu.memory_space<vmem>>, vector<2x16x64xf32>
    %c7 = arith.constant 7 : index
    %c0_40 = arith.constant 0 : index
    %48 = vector.load %arg2[%c7, %c0_40] : memref<9x64xf32, #tpu.memory_space<vmem>>, vector<1x64xf32>
    %49 = vector.shape_cast %48 : vector<1x64xf32> to vector<1x1x64xf32>
    %50 = vector.broadcast %49 : vector<1x1x64xf32> to vector<2x16x64xf32>
    %51 = arith.mulf %47, %50 : vector<2x16x64xf32>
    %52 = arith.addf %46, %51 : vector<2x16x64xf32>
    %c0_41 = arith.constant 0 : index
    %c2_42 = arith.constant 2 : index
    %c8_43 = arith.constant 8 : index
    %53 = vector.load %arg7[%c0_41, %c2_42, %c8_43] : memref<2x18x72xf32, #tpu.memory_space<vmem>>, vector<2x16x64xf32>
    %c8_44 = arith.constant 8 : index
    %c0_45 = arith.constant 0 : index
    %54 = vector.load %arg2[%c8_44, %c0_45] : memref<9x64xf32, #tpu.memory_space<vmem>>, vector<1x64xf32>
    %55 = vector.shape_cast %54 : vector<1x64xf32> to vector<1x1x64xf32>
    %56 = vector.broadcast %55 : vector<1x1x64xf32> to vector<2x16x64xf32>
    %57 = arith.mulf %53, %56 : vector<2x16x64xf32>
    %58 = arith.addf %52, %57 : vector<2x16x64xf32>
    %c0_46 = arith.constant 0 : index
    %c0_47 = arith.constant 0 : index
    %59 = vector.load %arg3[%c0_46, %c0_47] : memref<1x64xf32, #tpu.memory_space<vmem>>, vector<1x64xf32>
    %60 = vector.shape_cast %59 : vector<1x64xf32> to vector<1x1x64xf32>
    %61 = vector.broadcast %60 : vector<1x1x64xf32> to vector<2x16x64xf32>
    %62 = arith.addf %58, %61 : vector<2x16x64xf32>
    %cst_48 = arith.constant 5.000000e-01 : f32
    %63 = vector.broadcast %cst_48 : f32 to vector<2x16x64xf32>
    %64 = arith.mulf %63, %62 : vector<2x16x64xf32>
    %cst_49 = arith.constant 1.41421354 : f32
    %65 = vector.broadcast %cst_49 : f32 to vector<2x16x64xf32>
    %66 = arith.divf %62, %65 : vector<2x16x64xf32>
    %67 = math.erf %66 : vector<2x16x64xf32>
    %cst_50 = arith.constant 1.000000e+00 : f32
    %68 = vector.broadcast %cst_50 : f32 to vector<2x16x64xf32>
    %69 = arith.addf %68, %67 : vector<2x16x64xf32>
    %70 = arith.mulf %64, %69 : vector<2x16x64xf32>
    %71 = vector.shape_cast %70 : vector<2x16x64xf32> to vector<32x64xf32>
    %c0_51 = arith.constant 0 : index
    %c0_52 = arith.constant 0 : index
    %72 = vector.load %arg4[%c0_51, %c0_52] : memref<64x128xf32, #tpu.memory_space<vmem>>, vector<64x128xf32>
    %cst_53 = arith.constant dense<0.000000e+00> : vector<32x128xf32>
    %73 = tpu.matmul %71, %72, %cst_53 {dimension_numbers = #tpu.dot_dimension_numbers<[1], [0], [0], [1], [0, 0, 1, 1], [], []>} : vector<32x64xf32>, vector<64x128xf32>, vector<32x128xf32> -> vector<32x128xf32>
    %c0_54 = arith.constant 0 : index
    %c0_55 = arith.constant 0 : index
    %74 = vector.load %arg5[%c0_54, %c0_55] : memref<1x128xf32, #tpu.memory_space<vmem>>, vector<1x128xf32>
    %75 = vector.broadcast %74 : vector<1x128xf32> to vector<32x128xf32>
    %76 = arith.addf %73, %75 : vector<32x128xf32>
    %cst_56 = arith.constant 5.000000e-01 : f32
    %77 = vector.broadcast %cst_56 : f32 to vector<32x128xf32>
    %78 = arith.mulf %77, %76 : vector<32x128xf32>
    %cst_57 = arith.constant 1.41421354 : f32
    %79 = vector.broadcast %cst_57 : f32 to vector<32x128xf32>
    %80 = arith.divf %76, %79 : vector<32x128xf32>
    %81 = math.erf %80 : vector<32x128xf32>
    %cst_58 = arith.constant 1.000000e+00 : f32
    %82 = vector.broadcast %cst_58 : f32 to vector<32x128xf32>
    %83 = arith.addf %82, %81 : vector<32x128xf32>
    %84 = arith.mulf %78, %83 : vector<32x128xf32>
    %c0_59 = arith.constant 0 : index
    %c0_60 = arith.constant 0 : index
    %85 = vector.load %arg6[%c0_59, %c0_60] : memref<32x128xf32, #tpu.memory_space<vmem>>, vector<32x128xf32>
    tpu.vector_store %arg6[%c0_59, %c0_60], %84 {strides = array<i32>} : memref<32x128xf32, #tpu.memory_space<vmem>>, vector<32x128xf32>,
    return
  }
  func.func @transform_0(%arg0: i32) -> (i32, i32, i32) {
    %c0_i32 = arith.constant 0 : i32
    %c0_i32_0 = arith.constant 0 : i32
    %c0_i32_1 = arith.constant 0 : i32
    return %arg0, %c0_i32, %c0_i32_0 : i32, i32, i32
  }
  func.func @transform_1(%arg0: i32) -> (i32, i32) {
    %c0_i32 = arith.constant 0 : i32
    %c0_i32_0 = arith.constant 0 : i32
    %c0_i32_1 = arith.constant 0 : i32
    return %c0_i32, %c0_i32_0 : i32, i32
  }
  func.func @transform_2(%arg0: i32) -> (i32, i32) {
    %c0_i32 = arith.constant 0 : i32
    %c0_i32_0 = arith.constant 0 : i32
    %c0_i32_1 = arith.constant 0 : i32
    return %c0_i32, %c0_i32_0 : i32, i32
  }
  func.func @transform_3(%arg0: i32) -> (i32, i32) {
    %c0_i32 = arith.constant 0 : i32
    %c0_i32_0 = arith.constant 0 : i32
    %c0_i32_1 = arith.constant 0 : i32
    return %c0_i32, %c0_i32_0 : i32, i32
  }
  func.func @transform_4(%arg0: i32) -> (i32, i32) {
    %c0_i32 = arith.constant 0 : i32
    %c0_i32_0 = arith.constant 0 : i32
    %c0_i32_1 = arith.constant 0 : i32
    return %c0_i32, %c0_i32_0 : i32, i32
  }
  func.func @transform_5(%arg0: i32) -> (i32, i32) {
    %c0_i32 = arith.constant 0 : i32
    %c0_i32_0 = arith.constant 0 : i32
    return %arg0, %c0_i32 : i32, i32
  }
}

</mosaic_0001>

<llo_original>
// kernel: ds_conv2d.1
$region0: #{ds_conv2d.1}
  #allocation0 [shape = 'u32[]', space=smem, size = 0x4, offset = 0x4, fixed_abs, tag = 'smem constant byte address 0x4 - core index']
  #allocation1 [shape = 'u32[72,128]{1,0:T(1,128)}', space=vmem, size = 0x9000, scoped, tag = 'internal scratch']
  #allocation2 [shape = 'f32[2,18,72]{2,1,0:T(8,128)}', space=vmem, size = 0x6000, scoped, tag = 'scratch operand']
  %s0 = inlined_call_operand.vmem [shape: f32[2,16,64], index: 0, kind: input, shape index: {}]
  %s1 = inlined_call_operand.vmem [shape: f32[9,64], index: 1, kind: input, shape index: {}]
  %s2 = inlined_call_operand.vmem [shape: f32[1,64], index: 2, kind: input, shape index: {}]
  %s3 = inlined_call_operand.vmem [shape: f32[64,128], index: 3, kind: input, shape index: {}]
  %s4 = inlined_call_operand.vmem [shape: f32[1,128], index: 4, kind: input, shape index: {}]
  %s5 = inlined_call_operand.vmem [shape: f32[32,128], index: 5, kind: output, shape index: {}]
  %s6 = sld [smem:[#allocation0]]
  $region30: #{ds_conv2d.1} parent=0
    _
  %s8 = ssub.s32 1, %s6
  %s9 = scalar_select 0, %s8, %s6
  // Predicated region
  $region2: #{ds_conv2d.1} parent=0 // pred_check
    _
  $region3: #{ds_conv2d.1} parent=0 // pred_check_branch
    %11 = sbr.rel (0) target = $region5
  $region4: #{ds_conv2d.1} parent=0 // pred_region
    _
  $region5: #{ds_conv2d.1} parent=0 // pred_fallthru
    _
  // Predicated region
  $region6: #{ds_conv2d.1} parent=0 // pred_check
    _
  $region7: #{ds_conv2d.1} parent=0 // pred_check_branch
    %13 = sbr.rel (0) target = $region9
  $region8: #{ds_conv2d.1} parent=0 // pred_region
    _
  $region9: #{ds_conv2d.1} parent=0 // pred_fallthru
    _
  // Predicated region
  $region10: #{ds_conv2d.1} parent=0 // pred_check
    _
  $region11: #{ds_conv2d.1} parent=0 // pred_check_branch
    %15 = sbr.rel (0) target = $region13
  $region12: #{ds_conv2d.1} parent=0 // pred_region
    _
  $region13: #{ds_conv2d.1} parent=0 // pred_fallthru
    _
  // Predicated region
  $region14: #{ds_conv2d.1} parent=0 // pred_check
    _
  $region15: #{ds_conv2d.1} parent=0 // pred_check_branch
    %17 = sbr.rel (0) target = $region17
  $region16: #{ds_conv2d.1} parent=0 // pred_region
    _
  $region17: #{ds_conv2d.1} parent=0 // pred_fallthru
    _
  // Predicated region
  $region18: #{ds_conv2d.1} parent=0 // pred_check
    _
  $region19: #{ds_conv2d.1} parent=0 // pred_check_branch
    %19 = sbr.rel (0) target = $region21
  $region20: #{ds_conv2d.1} parent=0 // pred_region
    _
  $region21: #{ds_conv2d.1} parent=0 // pred_fallthru
    _
  %vm20 = vcmask 588800
  %21 = vst.msk [vmem:[#allocation2] sm:$0xff] %vm20, 0.0
  %22 = vst.msk [vmem:[#allocation2 + $0x8] sm:$0xff] %vm20, 0.0
  %vm23 = vcmask 582656
  %24 = vst.msk [vmem:[#allocation2 + $0x10] sm:$0x3] %vm23, 0.0
  %25 = vst.msk [vmem:[#allocation2 + $0x18] sm:$0xff] %vm20, 0.0
  %26 = vst.msk [vmem:[#allocation2 + $0x20] sm:$0xff] %vm20, 0.0
  %27 = vst.msk [vmem:[#allocation2 + $0x28] sm:$0x3] %vm23, 0.0
  %v28 = vld [vmem:[%s0] sm:$0xff]
  %v29 = vld [vmem:[%s0 + $0x8] sm:$0xff]
  %v30 = vld [vmem:[%s0 + $0x10] sm:$0xff]
  %v31 = vld [vmem:[%s0 + $0x18] sm:$0xff]
  %36 = vrot.lane.b32.xlu0 %v28, 4
  %v37 = vpop.permute.xlu0 %36
  %38 = vrot.lane.b32.xlu0 %v29, 4
  %v39 = vpop.permute.xlu0 %38
  %40 = vrot.lane.b32.xlu0 %v30, 4
  %v41 = vpop.permute.xlu0 %40
  %42 = vrot.lane.b32.xlu0 %v31, 4
  %v43 = vpop.permute.xlu0 %42
  %vm48 = vcmask 556064
  %49 = vst.msk [vmem:[#allocation2 + $0x1] sm:$0xff] %vm48, %v37
  %50 = vst.msk [vmem:[#allocation2 + $0x9] sm:$0xff] %vm48, %v39
  %51 = vst.msk [vmem:[#allocation2 + $0x19] sm:$0xff] %vm48, %v41
  %52 = vst.msk [vmem:[#allocation2 + $0x21] sm:$0xff] %vm48, %v43
  %v53 = vld [vmem:[#allocation2] sm:$0xff]
  %v54 = vld [vmem:[#allocation2 + $0x8] sm:$0xff]
  %v55 = vld [vmem:[#allocation2 + $0x18] sm:$0xff]
  %v56 = vld [vmem:[#allocation2 + $0x20] sm:$0xff]
  %v57 = vld [vmem:[%s1] sm:$0x1]
  %v58 = vperm.slane %v57, 0
  %v59 = vmul.f32 %v53, %v58
  %v60 = vmul.f32 %v54, %v58
  %v61 = vmul.f32 %v55, %v58
  %v62 = vmul.f32 %v56, %v58
  %v63 = vadd.f32 %v59, 0.0
  %v64 = vadd.f32 %v60, 0.0
  %v65 = vadd.f32 %v61, 0.0
  %v66 = vadd.f32 %v62, 0.0
  %v67 = vld [vmem:[%s1 + $0x1] sm:$0x1]
  %v68 = vperm.slane %v67, 0
  %70 = vrot.lane.b32.xlu0 %v68, 4
  %v71 = vpop.permute.xlu0 %70
  %v73 = vmul.f32 %v53, %v71
  %v74 = vmul.f32 %v54, %v71
  %v75 = vmul.f32 %v55, %v71
  %v76 = vmul.f32 %v56, %v71
  %81 = vrot.lane.b32.xlu0 %v73, 124
  %v82 = vpop.permute.xlu0 %81
  %83 = vrot.lane.b32.xlu0 %v74, 124
  %v84 = vpop.permute.xlu0 %83
  %85 = vrot.lane.b32.xlu0 %v75, 124
  %v86 = vpop.permute.xlu0 %85
  %87 = vrot.lane.b32.xlu0 %v76, 124
  %v88 = vpop.permute.xlu0 %87
  %v93 = vadd.f32 %v63, %v82
  %v94 = vadd.f32 %v64, %v84
  %v95 = vadd.f32 %v65, %v86
  %v96 = vadd.f32 %v66, %v88
  %v97 = vld [vmem:[%s1 + $0x2] sm:$0x1]
  %v98 = vperm.slane %v97, 0
  %100 = vrot.lane.b32.xlu0 %v98, 8
  %v101 = vpop.permute.xlu0 %100
  %v103 = vmul.f32 %v53, %v101
  %v104 = vmul.f32 %v54, %v101
  %v105 = vmul.f32 %v55, %v101
  %v106 = vmul.f32 %v56, %v101
  %111 = vrot.lane.b32.xlu0 %v103, 120
  %v112 = vpop.permute.xlu0 %111
  %113 = vrot.lane.b32.xlu0 %v104, 120
  %v114 = vpop.permute.xlu0 %113
  %115 = vrot.lane.b32.xlu0 %v105, 120
  %v116 = vpop.permute.xlu0 %115
  %117 = vrot.lane.b32.xlu0 %v106, 120
  %v118 = vpop.permute.xlu0 %117
  %v123 = vadd.f32 %v93, %v112
  %v124 = vadd.f32 %v94, %v114
  %v125 = vadd.f32 %v95, %v116
  %v126 = vadd.f32 %v96, %v118
  %v127 = vld [vmem:[#allocation2 + $0x1] sm:$0xff]
  %v128 = vld [vmem:[#allocation2 + $0x9] sm:$0xff]
  %v129 = vld [vmem:[#allocation2 + $0x19] sm:$0xff]
  %v130 = vld [vmem:[#allocation2 + $0x21] sm:$0xff]
  %v131 = vld [vmem:[%s1 + $0x3] sm:$0x1]
  %v132 = vperm.slane %v131, 0
  %v133 = vmul.f32 %v127, %v132
  %v134 = vmul.f32 %v128, %v132
  %v135 = vmul.f32 %v129, %v132
  %v136 = vmul.f32 %v130, %v132
  %v137 = vadd.f32 %v123, %v133
  %v138 = vadd.f32 %v124, %v134
  %v139 = vadd.f32 %v125, %v135
  %v140 = vadd.f32 %v126, %v136
  %v141 = vld [vmem:[%s1 + $0x4] sm:$0x1]
  %v142 = vperm.slane %v141, 0
  %144 = vrot.lane.b32.xlu0 %v142, 4
  %v145 = vpop.permute.xlu0 %144
  %v147 = vmul.f32 %v127, %v145
  %v148 = vmul.f32 %v128, %v145
  %v149 = vmul.f32 %v129, %v145
  %v150 = vmul.f32 %v130, %v145
  %155 = vrot.lane.b32.xlu0 %v147, 124
  %v156 = vpop.permute.xlu0 %155
  %157 = vrot.lane.b32.xlu0 %v148, 124
  %v158 = vpop.permute.xlu0 %157
  %159 = vrot.lane.b32.xlu0 %v149, 124
  %v160 = vpop.permute.xlu0 %159
  %161 = vrot.lane.b32.xlu0 %v150, 124
  %v162 = vpop.permute.xlu0 %161
  %v167 = vadd.f32 %v137, %v156
  %v168 = vadd.f32 %v138, %v158
  %v169 = vadd.f32 %v139, %v160
  %v170 = vadd.f32 %v140, %v162
  %v171 = vld [vmem:[%s1 + $0x5] sm:$0x1]
  %v172 = vperm.slane %v171, 0
  %174 = vrot.lane.b32.xlu0 %v172, 8
  %v175 = vpop.permute.xlu0 %174
  %v177 = vmul.f32 %v127, %v175
  %v178 = vmul.f32 %v128, %v175
  %v179 = vmul.f32 %v129, %v175
  %v180 = vmul.f32 %v130, %v175
  %185 = vrot.lane.b32.xlu0 %v177, 120
  %v186 = vpop.permute.xlu0 %185
  %187 = vrot.lane.b32.xlu0 %v178, 120
  %v188 = vpop.permute.xlu0 %187
  %189 = vrot.lane.b32.xlu0 %v179, 120
  %v190 = vpop.permute.xlu0 %189
  %191 = vrot.lane.b32.xlu0 %v180, 120
  %v192 = vpop.permute.xlu0 %191
  %v197 = vadd.f32 %v167, %v186
  %v198 = vadd.f32 %v168, %v188
  %v199 = vadd.f32 %v169, %v190
  %v200 = vadd.f32 %v170, %v192
  %v201 = vld [vmem:[#allocation2 + $0x2] sm:$0xff]
  %v202 = vld [vmem:[#allocation2 + $0xa] sm:$0xff]
  %v203 = vld [vmem:[#allocation2 + $0x1a] sm:$0xff]
  %v204 = vld [vmem:[#allocation2 + $0x22] sm:$0xff]
  %v205 = vld [vmem:[%s1 + $0x6] sm:$0x1]
  %v206 = vperm.slane %v205, 0
  %v207 = vmul.f32 %v201, %v206
  %v208 = vmul.f32 %v202, %v206
  %v209 = vmul.f32 %v203, %v206
  %v210 = vmul.f32 %v204, %v206
  %v211 = vadd.f32 %v197, %v207
  %v212 = vadd.f32 %v198, %v208
  %v213 = vadd.f32 %v199, %v209
  %v214 = vadd.f32 %v200, %v210
  %v215 = vld [vmem:[%s1 + $0x7] sm:$0x1]
  %v216 = vperm.slane %v215, 0
  %218 = vrot.lane.b32.xlu0 %v216, 4
  %v219 = vpop.permute.xlu0 %218
  %v221 = vmul.f32 %v201, %v219
  %v222 = vmul.f32 %v202, %v219
  %v223 = vmul.f32 %v203, %v219
  %v224 = vmul.f32 %v204, %v219
  %229 = vrot.lane.b32.xlu0 %v221, 124
  %v230 = vpop.permute.xlu0 %229
  %231 = vrot.lane.b32.xlu0 %v222, 124
  %v232 = vpop.permute.xlu0 %231
  %233 = vrot.lane.b32.xlu0 %v223, 124
  %v234 = vpop.permute.xlu0 %233
  %235 = vrot.lane.b32.xlu0 %v224, 124
  %v236 = vpop.permute.xlu0 %235
  %v241 = vadd.f32 %v211, %v230
  %v242 = vadd.f32 %v212, %v232
  %v243 = vadd.f32 %v213, %v234
  %v244 = vadd.f32 %v214, %v236
  %v245 = vld [vmem:[%s1 + $0x8] sm:$0x1]
  %v246 = vperm.slane %v245, 0
  %248 = vrot.lane.b32.xlu0 %v246, 8
  %v249 = vpop.permute.xlu0 %248
  %v251 = vmul.f32 %v201, %v249
  %v252 = vmul.f32 %v202, %v249
  %v253 = vmul.f32 %v203, %v249
  %v254 = vmul.f32 %v204, %v249
  %259 = vrot.lane.b32.xlu0 %v251, 120
  %v260 = vpop.permute.xlu0 %259
  %261 = vrot.lane.b32.xlu0 %v252, 120
  %v262 = vpop.permute.xlu0 %261
  %263 = vrot.lane.b32.xlu0 %v253, 120
  %v264 = vpop.permute.xlu0 %263
  %265 = vrot.lane.b32.xlu0 %v254, 120
  %v266 = vpop.permute.xlu0 %265
  %v271 = vadd.f32 %v241, %v260
  %v272 = vadd.f32 %v242, %v262
  %v273 = vadd.f32 %v243, %v264
  %v274 = vadd.f32 %v244, %v266
  %v275 = vld [vmem:[%s2] sm:$0x1]
  %v277 = vperm.slane %v275, 0
  %v279 = vadd.f32 %v271, %v277
  %v280 = vadd.f32 %v272, %v277
  %v281 = vadd.f32 %v273, %v277
  %v282 = vadd.f32 %v274, %v277
  %v283 = vmul.f32 %v279, 0.5
  %v284 = vmul.f32 %v280, 0.5
  %v285 = vmul.f32 %v281, 0.5
  %v286 = vmul.f32 %v282, 0.5
  %v287 = vrcp.pop 1.4142135
  %v288 = vmul.f32 1.4142135, %v287
  %v289 = vsub.f32 1.0, %v288
  %v290 = vmul.f32 %v287, %v289
  %v291 = vadd.f32 %v287, %v290
  %vm292 = vweird.f32 %v287
  %v293 = vsel %vm292, %v287, %v291
  %v294 = vmul.f32 %v279, %v293
  %v295 = vmul.f32 %v280, %v293
  %v296 = vmul.f32 %v281, %v293
  %v297 = vmul.f32 %v282, %v293
  %v298 = vmul.f32 %v294, %v294
  %v299 = vmin.f32 16.0, %v298
  %v300 = vmul.f32 %v299, 2.1237322e-06
  %v301 = vadd.f32 %v300, 0.00028619796
  %v302 = vmul.f32 %v299, %v301
  %v303 = vadd.f32 %v302, 0.0036580483
  %v304 = vmul.f32 %v299, %v303
  %v305 = vadd.f32 %v304, 0.05243302
  %v306 = vmul.f32 %v299, %v305
  %v307 = vadd.f32 %v306, 0.18741608
  %v308 = vmul.f32 %v299, %v307
  %v309 = vadd.f32 %v308, 1.1283791
  %v310 = vmul.f32 %v294, %v309
  %v311 = vmul.f32 %v299, 3.8918573e-05
  %v312 = vadd.f32 %v311, 0.001143296
  %v313 = vmul.f32 %v299, %v312
  %v314 = vadd.f32 %v313, 0.014752088
  %v315 = vmul.f32 %v299, %v314
  %v316 = vadd.f32 %v315, 0.112945676
  %v317 = vmul.f32 %v299, %v316
  %v318 = vadd.f32 %v317, 0.4994258
  %v319 = vmul.f32 %v299, %v318
  %v320 = vadd.f32 %v319, 1.0
  %v321 = vrcp.pop %v320
  %v322 = vmul.f32 %v320, %v321
  %v323 = vsub.f32 1.0, %v322
  %v324 = vmul.f32 %v321, %v323
  %v325 = vadd.f32 %v321, %v324
  %vm326 = vweird.f32 %v320
  %vm327 = vweird.f32 %v321
  %vm328 = vmor %vm326, %vm327
  %v329 = vsel %vm328, %v321, %v325
  %v330 = vand.u32 2147483647, %v320
  %vm331 = vcmp.eq.f32.partialorder %v330, 8.507059e+37
  %v332 = vand.u32 %v320, 2147483648
  %v333 = vor.u32 1.1754944e-38, %v332
  %v334 = vsel %vm331, %v333, %v329
  %v335 = vmul.f32 %v310, %v334
  %v336 = vmin.f32 %v335, 1.0
  %v337 = vmax.f32 %v336, -1.0
  %v338 = vmul.f32 %v295, %v295
  %v339 = vmin.f32 16.0, %v338
  %v340 = vmul.f32 %v339, 2.1237322e-06
  %v341 = vadd.f32 %v340, 0.00028619796
  %v342 = vmul.f32 %v339, %v341
  %v343 = vadd.f32 %v342, 0.0036580483
  %v344 = vmul.f32 %v339, %v343
  %v345 = vadd.f32 %v344, 0.05243302
  %v346 = vmul.f32 %v339, %v345
  %v347 = vadd.f32 %v346, 0.18741608
  %v348 = vmul.f32 %v339, %v347
  %v349 = vadd.f32 %v348, 1.1283791
  %v350 = vmul.f32 %v295, %v349
  %v351 = vmul.f32 %v339, 3.8918573e-05
  %v352 = vadd.f32 %v351, 0.001143296
  %v353 = vmul.f32 %v339, %v352
  %v354 = vadd.f32 %v353, 0.014752088
  %v355 = vmul.f32 %v339, %v354
  %v356 = vadd.f32 %v355, 0.112945676
  %v357 = vmul.f32 %v339, %v356
  %v358 = vadd.f32 %v357, 0.4994258
  %v359 = vmul.f32 %v339, %v358
  %v360 = vadd.f32 %v359, 1.0
  %v361 = vrcp.pop %v360
  %v362 = vmul.f32 %v360, %v361
  %v363 = vsub.f32 1.0, %v362
  %v364 = vmul.f32 %v361, %v363
  %v365 = vadd.f32 %v361, %v364
  %vm366 = vweird.f32 %v360
  %vm367 = vweird.f32 %v361
  %vm368 = vmor %vm366, %vm367
  %v369 = vsel %vm368, %v361, %v365
  %v370 = vand.u32 2147483647, %v360
  %vm371 = vcmp.eq.f32.partialorder %v370, 8.507059e+37
  %v372 = vand.u32 %v360, 2147483648
  %v373 = vor.u32 1.1754944e-38, %v372
  %v374 = vsel %vm371, %v373, %v369
  %v375 = vmul.f32 %v350, %v374
  %v376 = vmin.f32 %v375, 1.0
  %v377 = vmax.f32 %v376, -1.0
  %v378 = vmul.f32 %v296, %v296
  %v379 = vmin.f32 16.0, %v378
  %v380 = vmul.f32 %v379, 2.1237322e-06
  %v381 = vadd.f32 %v380, 0.00028619796
  %v382 = vmul.f32 %v379, %v381
  %v383 = vadd.f32 %v382, 0.0036580483
  %v384 = vmul.f32 %v379, %v383
  %v385 = vadd.f32 %v384, 0.05243302
  %v386 = vmul.f32 %v379, %v385
  %v387 = vadd.f32 %v386, 0.18741608
  %v388 = vmul.f32 %v379, %v387
  %v389 = vadd.f32 %v388, 1.1283791
  %v390 = vmul.f32 %v296, %v389
  %v391 = vmul.f32 %v379, 3.8918573e-05
  %v392 = vadd.f32 %v391, 0.001143296
  %v393 = vmul.f32 %v379, %v392
  %v394 = vadd.f32 %v393, 0.014752088
  %v395 = vmul.f32 %v379, %v394
  %v396 = vadd.f32 %v395, 0.112945676
  %v397 = vmul.f32 %v379, %v396
  %v398 = vadd.f32 %v397, 0.4994258
  %v399 = vmul.f32 %v379, %v398
  %v400 = vadd.f32 %v399, 1.0
  %v401 = vrcp.pop %v400
  %v402 = vmul.f32 %v400, %v401
  %v403 = vsub.f32 1.0, %v402
  %v404 = vmul.f32 %v401, %v403
  %v405 = vadd.f32 %v401, %v404
  %vm406 = vweird.f32 %v400
  %vm407 = vweird.f32 %v401
  %vm408 = vmor %vm406, %vm407
  %v409 = vsel %vm408, %v401, %v405
  %v410 = vand.u32 2147483647, %v400
  %vm411 = vcmp.eq.f32.partialorder %v410, 8.507059e+37
  %v412 = vand.u32 %v400, 2147483648
  %v413 = vor.u32 1.1754944e-38, %v412
  %v414 = vsel %vm411, %v413, %v409
  %v415 = vmul.f32 %v390, %v414
  %v416 = vmin.f32 %v415, 1.0
  %v417 = vmax.f32 %v416, -1.0
  %v418 = vmul.f32 %v297, %v297
  %v419 = vmin.f32 16.0, %v418
  %v420 = vmul.f32 %v419, 2.1237322e-06
  %v421 = vadd.f32 %v420, 0.00028619796
  %v422 = vmul.f32 %v419, %v421
  %v423 = vadd.f32 %v422, 0.0036580483
  %v424 = vmul.f32 %v419, %v423
  %v425 = vadd.f32 %v424, 0.05243302
  %v426 = vmul.f32 %v419, %v425
  %v427 = vadd.f32 %v426, 0.18741608
  %v428 = vmul.f32 %v419, %v427
  %v429 = vadd.f32 %v428, 1.1283791
  %v430 = vmul.f32 %v297, %v429
  %v431 = vmul.f32 %v419, 3.8918573e-05
  %v432 = vadd.f32 %v431, 0.001143296
  %v433 = vmul.f32 %v419, %v432
  %v434 = vadd.f32 %v433, 0.014752088
  %v435 = vmul.f32 %v419, %v434
  %v436 = vadd.f32 %v435, 0.112945676
  %v437 = vmul.f32 %v419, %v436
  %v438 = vadd.f32 %v437, 0.4994258
  %v439 = vmul.f32 %v419, %v438
  %v440 = vadd.f32 %v439, 1.0
  %v441 = vrcp.pop %v440
  %v442 = vmul.f32 %v440, %v441
  %v443 = vsub.f32 1.0, %v442
  %v444 = vmul.f32 %v441, %v443
  %v445 = vadd.f32 %v441, %v444
  %vm446 = vweird.f32 %v440
  %vm447 = vweird.f32 %v441
  %vm448 = vmor %vm446, %vm447
  %v449 = vsel %vm448, %v441, %v445
  %v450 = vand.u32 2147483647, %v440
  %vm451 = vcmp.eq.f32.partialorder %v450, 8.507059e+37
  %v452 = vand.u32 %v440, 2147483648
  %v453 = vor.u32 1.1754944e-38, %v452
  %v454 = vsel %vm451, %v453, %v449
  %v455 = vmul.f32 %v430, %v454
  %v456 = vmin.f32 %v455, 1.0
  %v457 = vmax.f32 %v456, -1.0
  %v458 = vadd.f32 %v337, 1.0
  %v459 = vadd.f32 %v377, 1.0
  %v460 = vadd.f32 %v417, 1.0
  %v461 = vadd.f32 %v457, 1.0
  %v462 = vmul.f32 %v283, %v458
  %v463 = vmul.f32 %v284, %v459
  %v464 = vmul.f32 %v285, %v460
  %v465 = vmul.f32 %v286, %v461
  %v466 = vld [vmem:[%s3] sm:$0xff]
  %v467 = vld [vmem:[%s3 + $0x8] sm:$0xff]
  %v468 = vld [vmem:[%s3 + $0x10] sm:$0xff]
  %v469 = vld [vmem:[%s3 + $0x18] sm:$0xff]
  %v470 = vld [vmem:[%s3 + $0x20] sm:$0xff]
  %v471 = vld [vmem:[%s3 + $0x28] sm:$0xff]
  %v472 = vld [vmem:[%s3 + $0x30] sm:$0xff]
  %v473 = vld [vmem:[%s3 + $0x38] sm:$0xff]
  %v474 = vld [vmem:[%s4] sm:$0x1]
  %v476 = vperm.slane %v474, 0
  %vm478 = vcmask 523264
  %v480 = vsel %vm478, %v462, 0
  %v483 = vsel %vm478, %v463, 0
  %v486 = vsel %vm478, %v464, 0
  %v489 = vsel %vm478, %v465, 0
  %491 = vmatpush.msra.mxu0 0.0
  %492 = vmatpush.msra.mxu0 0.0
  %493 = vmatpush.msra.mxu0 0.0
  %494 = vmatpush.msra.mxu0 0.0
  %495 = vmatpush.msra.mxu0 0.0
  %496 = vmatpush.msra.mxu0 0.0
  %497 = vmatpush.msra.mxu0 0.0
  %498 = vmatpush.msra.mxu0 0.0
  %499 = vmatpush.msra.mxu0 %v473
  %500 = vmatpush.msra.mxu0 %v472
  %501 = vmatpush.msra.mxu0 %v471
  %502 = vmatpush.msra.mxu0 %v470
  %503 = vmatpush.msra.mxu0 %v469
  %504 = vmatpush.msra.mxu0 %v468
  %505 = vmatpush.msra.mxu0 %v467
  %506 = vmatpush.msra.mxu0 %v466
  %507 = vmatmul.f32.gmra.mxu0 %v480
  %v508 = vpop.f32.mrf.mxu0
  %v509 = vadd.f32 %v476, %v508
  %510 = vmatmul.f32.gmra.mxu0 %v483
  %v511 = vpop.f32.mrf.mxu0
  %v512 = vadd.f32 %v476, %v511
  %513 = vmatmul.f32.gmra.mxu0 %v486
  %v514 = vpop.f32.mrf.mxu0
  %v515 = vadd.f32 %v476, %v514
  %516 = vmatmul.f32.gmra.mxu0 %v489
  %v517 = vpop.f32.mrf.mxu0
  %v518 = vadd.f32 %v476, %v517
  %519 = vdwg.mxu0
  %v520 = vmul.f32 %v509, 0.5
  %v521 = vmul.f32 %v512, 0.5
  %v522 = vmul.f32 %v515, 0.5
  %v523 = vmul.f32 %v518, 0.5
  %v524 = vmul.f32 %v509, %v293
  %v525 = vmul.f32 %v512, %v293
  %v526 = vmul.f32 %v515, %v293
  %v527 = vmul.f32 %v518, %v293
  %v528 = vmul.f32 %v524, %v524
  %v529 = vmin.f32 16.0, %v528
  %v530 = vmul.f32 %v529, 2.1237322e-06
  %v531 = vadd.f32 %v530, 0.00028619796
  %v532 = vmul.f32 %v529, %v531
  %v533 = vadd.f32 %v532, 0.0036580483
  %v534 = vmul.f32 %v529, %v533
  %v535 = vadd.f32 %v534, 0.05243302
  %v536 = vmul.f32 %v529, %v535
  %v537 = vadd.f32 %v536, 0.18741608
  %v538 = vmul.f32 %v529, %v537
  %v539 = vadd.f32 %v538, 1.1283791
  %v540 = vmul.f32 %v524, %v539
  %v541 = vmul.f32 %v529, 3.8918573e-05
  %v542 = vadd.f32 %v541, 0.001143296
  %v543 = vmul.f32 %v529, %v542
  %v544 = vadd.f32 %v543, 0.014752088
  %v545 = vmul.f32 %v529, %v544
  %v546 = vadd.f32 %v545, 0.112945676
  %v547 = vmul.f32 %v529, %v546
  %v548 = vadd.f32 %v547, 0.4994258
  %v549 = vmul.f32 %v529, %v548
  %v550 = vadd.f32 %v549, 1.0
  %v551 = vrcp.pop %v550
  %v552 = vmul.f32 %v550, %v551
  %v553 = vsub.f32 1.0, %v552
  %v554 = vmul.f32 %v551, %v553
  %v555 = vadd.f32 %v551, %v554
  %vm556 = vweird.f32 %v550
  %vm557 = vweird.f32 %v551
  %vm558 = vmor %vm556, %vm557
  %v559 = vsel %vm558, %v551, %v555
  %v560 = vand.u32 2147483647, %v550
  %vm561 = vcmp.eq.f32.partialorder %v560, 8.507059e+37
  %v562 = vand.u32 %v550, 2147483648
  %v563 = vor.u32 1.1754944e-38, %v562
  %v564 = vsel %vm561, %v563, %v559
  %v565 = vmul.f32 %v540, %v564
  %v566 = vmin.f32 %v565, 1.0
  %v567 = vmax.f32 %v566, -1.0
  %v568 = vmul.f32 %v525, %v525
  %v569 = vmin.f32 16.0, %v568
  %v570 = vmul.f32 %v569, 2.1237322e-06
  %v571 = vadd.f32 %v570, 0.00028619796
  %v572 = vmul.f32 %v569, %v571
  %v573 = vadd.f32 %v572, 0.0036580483
  %v574 = vmul.f32 %v569, %v573
  %v575 = vadd.f32 %v574, 0.05243302
  %v576 = vmul.f32 %v569, %v575
  %v577 = vadd.f32 %v576, 0.18741608
  %v578 = vmul.f32 %v569, %v577
  %v579 = vadd.f32 %v578, 1.1283791
  %v580 = vmul.f32 %v525, %v579
  %v581 = vmul.f32 %v569, 3.8918573e-05
  %v582 = vadd.f32 %v581, 0.001143296
  %v583 = vmul.f32 %v569, %v582
  %v584 = vadd.f32 %v583, 0.014752088
  %v585 = vmul.f32 %v569, %v584
  %v586 = vadd.f32 %v585, 0.112945676
  %v587 = vmul.f32 %v569, %v586
  %v588 = vadd.f32 %v587, 0.4994258
  %v589 = vmul.f32 %v569, %v588
  %v590 = vadd.f32 %v589, 1.0
  %v591 = vrcp.pop %v590
  %v592 = vmul.f32 %v590, %v591
  %v593 = vsub.f32 1.0, %v592
  %v594 = vmul.f32 %v591, %v593
  %v595 = vadd.f32 %v591, %v594
  %vm596 = vweird.f32 %v590
  %vm597 = vweird.f32 %v591
  %vm598 = vmor %vm596, %vm597
  %v599 = vsel %vm598, %v591, %v595
  %v600 = vand.u32 2147483647, %v590
  %vm601 = vcmp.eq.f32.partialorder %v600, 8.507059e+37
  %v602 = vand.u32 %v590, 2147483648
  %v603 = vor.u32 1.1754944e-38, %v602
  %v604 = vsel %vm601, %v603, %v599
  %v605 = vmul.f32 %v580, %v604
  %v606 = vmin.f32 %v605, 1.0
  %v607 = vmax.f32 %v606, -1.0
  %v608 = vmul.f32 %v526, %v526
  %v609 = vmin.f32 16.0, %v608
  %v610 = vmul.f32 %v609, 2.1237322e-06
  %v611 = vadd.f32 %v610, 0.00028619796
  %v612 = vmul.f32 %v609, %v611
  %v613 = vadd.f32 %v612, 0.0036580483
  %v614 = vmul.f32 %v609, %v613
  %v615 = vadd.f32 %v614, 0.05243302
  %v616 = vmul.f32 %v609, %v615
  %v617 = vadd.f32 %v616, 0.18741608
  %v618 = vmul.f32 %v609, %v617
  %v619 = vadd.f32 %v618, 1.1283791
  %v620 = vmul.f32 %v526, %v619
  %v621 = vmul.f32 %v609, 3.8918573e-05
  %v622 = vadd.f32 %v621, 0.001143296
  %v623 = vmul.f32 %v609, %v622
  %v624 = vadd.f32 %v623, 0.014752088
  %v625 = vmul.f32 %v609, %v624
  %v626 = vadd.f32 %v625, 0.112945676
  %v627 = vmul.f32 %v609, %v626
  %v628 = vadd.f32 %v627, 0.4994258
  %v629 = vmul.f32 %v609, %v628
  %v630 = vadd.f32 %v629, 1.0
  %v631 = vrcp.pop %v630
  %v632 = vmul.f32 %v630, %v631
  %v633 = vsub.f32 1.0, %v632
  %v634 = vmul.f32 %v631, %v633
  %v635 = vadd.f32 %v631, %v634
  %vm636 = vweird.f32 %v630
  %vm637 = vweird.f32 %v631
  %vm638 = vmor %vm636, %vm637
  %v639 = vsel %vm638, %v631, %v635
  %v640 = vand.u32 2147483647, %v630
  %vm641 = vcmp.eq.f32.partialorder %v640, 8.507059e+37
  %v642 = vand.u32 %v630, 2147483648
  %v643 = vor.u32 1.1754944e-38, %v642
  %v644 = vsel %vm641, %v643, %v639
  %v645 = vmul.f32 %v620, %v644
  %v646 = vmin.f32 %v645, 1.0
  %v647 = vmax.f32 %v646, -1.0
  %v648 = vmul.f32 %v527, %v527
  %v649 = vmin.f32 16.0, %v648
  %v650 = vmul.f32 %v649, 2.1237322e-06
  %v651 = vadd.f32 %v650, 0.00028619796
  %v652 = vmul.f32 %v649, %v651
  %v653 = vadd.f32 %v652, 0.0036580483
  %v654 = vmul.f32 %v649, %v653
  %v655 = vadd.f32 %v654, 0.05243302
  %v656 = vmul.f32 %v649, %v655
  %v657 = vadd.f32 %v656, 0.18741608
  %v658 = vmul.f32 %v649, %v657
  %v659 = vadd.f32 %v658, 1.1283791
  %v660 = vmul.f32 %v527, %v659
  %v661 = vmul.f32 %v649, 3.8918573e-05
  %v662 = vadd.f32 %v661, 0.001143296
  %v663 = vmul.f32 %v649, %v662
  %v664 = vadd.f32 %v663, 0.014752088
  %v665 = vmul.f32 %v649, %v664
  %v666 = vadd.f32 %v665, 0.112945676
  %v667 = vmul.f32 %v649, %v666
  %v668 = vadd.f32 %v667, 0.4994258
  %v669 = vmul.f32 %v649, %v668
  %v670 = vadd.f32 %v669, 1.0
  %v671 = vrcp.pop %v670
  %v672 = vmul.f32 %v670, %v671
  %v673 = vsub.f32 1.0, %v672
  %v674 = vmul.f32 %v671, %v673
  %v675 = vadd.f32 %v671, %v674
  %vm676 = vweird.f32 %v670
  %vm677 = vweird.f32 %v671
  %vm678 = vmor %vm676, %vm677
  %v679 = vsel %vm678, %v671, %v675
  %v680 = vand.u32 2147483647, %v670
  %vm681 = vcmp.eq.f32.partialorder %v680, 8.507059e+37
  %v682 = vand.u32 %v670, 2147483648
  %v683 = vor.u32 1.1754944e-38, %v682
  %v684 = vsel %vm681, %v683, %v679
  %v685 = vmul.f32 %v660, %v684
  %v686 = vmin.f32 %v685, 1.0
  %v687 = vmax.f32 %v686, -1.0
  %v688 = vadd.f32 %v567, 1.0
  %v689 = vadd.f32 %v607, 1.0
  %v690 = vadd.f32 %v647, 1.0
  %v691 = vadd.f32 %v687, 1.0
  %v692 = vmul.f32 %v520, %v688
  %v693 = vmul.f32 %v521, %v689
  %v694 = vmul.f32 %v522, %v690
  %v695 = vmul.f32 %v523, %v691
  %696 = vst [vmem:[%s5] sm:$0xff] %v692
  %697 = vst [vmem:[%s5 + $0x8] sm:$0xff] %v693
  %698 = vst [vmem:[%s5 + $0x10] sm:$0xff] %v694
  %699 = vst [vmem:[%s5 + $0x18] sm:$0xff] %v695
  // Predicated region
  $region22: #{ds_conv2d.1} parent=0 // pred_check
    _
  $region23: #{ds_conv2d.1} parent=0 // pred_check_branch
    %701 = sbr.rel (0) target = $region25
  $region24: #{ds_conv2d.1} parent=0 // pred_region
    _
  $region25: #{ds_conv2d.1} parent=0 // pred_fallthru
    _
  // Predicated region
  $region26: #{ds_conv2d.1} parent=0 // pred_check
    _
  $region27: #{ds_conv2d.1} parent=0 // pred_check_branch
    %703 = sbr.rel (0) target = $region29
  $region28: #{ds_conv2d.1} parent=0 // pred_region
    _
  $region29: #{ds_conv2d.1} parent=0 // pred_fallthru
    _

</llo_original>
